<compile_context>
chip_gen: v5e
topology: v5e:2x2
jax: 0.10.0
libtpu: 0.0.40
codegen_flags: <defaults>
</compile_context>

<pallas_src>
import functools

import jax
import jax.numpy as jnp
from jax.experimental import pallas as pl
from jax.experimental.pallas import tpu as pltpu

LANE = 128


def conv_1d_same_padding(kernel_size: int) -> int:
    # "same" padding for stride-1 Conv1d with odd kernel size (ResidualBind).
    return kernel_size // 2


# ---------------------------------------------------------------------------
# In-kernel helpers
# ---------------------------------------------------------------------------
def _conv_taps_fused(x_pad_bf16, w_ref, kernel_size, out_len):
    """K-tap "same" conv along L as ONE MXU matmul (K*Cp-deep contraction).

    x_pad_bf16: (bt, L + 2*pad, Cp) bf16 value (already loaded, already bf16 —
                no per-tap casts).
    w_ref:      (K*Cp, Cp) bf16 ref, rows ordered tap-major then c_in, matching
                the channel-concatenated LHS below.
    Accumulation stays f32 via preferred_element_type.
    """
    taps = [x_pad_bf16[:, k:k + out_len, :] for k in range(kernel_size)]
    lhs = taps[0] if kernel_size == 1 else jnp.concatenate(taps, axis=-1)
    return jax.lax.dot_general(
        lhs, w_ref[...],
        dimension_numbers=(((2,), (0,)), ((), ())),
        preferred_element_type=jnp.float32)


def _write_stats(acc, sum_ref, m2_ref):
    """Per-tile, per-channel sum and tile-mean-centered sum of squares.

    Centering inside the tile (and combining tiles with Chan's formula in the
    wrapper) avoids the catastrophic cancellation of E[x^2] - E[x]^2.
    """
    s = jnp.sum(jnp.sum(acc, axis=1, keepdims=True), axis=0, keepdims=True)
    cnt = acc.shape[0] * acc.shape[1]
    d = acc - s * (1.0 / cnt)
    m2 = jnp.sum(jnp.sum(d * d, axis=1, keepdims=True), axis=0, keepdims=True)
    sum_ref[...] = s
    m2_ref[...] = m2


# ---------------------------------------------------------------------------
# Kernels (one batch tile per grid step)
# ---------------------------------------------------------------------------
def _conv1_stats_kernel(xp_ref, w_ref, y_ref, sum_ref, m2_ref, *, kernel_size):
    # conv1 (bias dropped: cancelled by the training-mode BN that follows)
    out_len = y_ref.shape[1]
    acc = _conv_taps_fused(xp_ref[...], w_ref, kernel_size, out_len)
    y_ref[...] = acc.astype(y_ref.dtype)                 # bf16 intermediate
    _write_stats(acc, sum_ref, m2_ref)


def _bn_relu_conv2_stats_kernel(y1_ref, scale_ref, shift_ref, w_ref,
                                y2_ref, sum_ref, m2_ref, tpad_ref,
                                *, kernel_size, pad):
    bt, out_len, cp = y1_ref.shape
    # folded bn1 (per-channel scale/shift) + relu in f32
    t = jnp.maximum(
        y1_ref[...].astype(jnp.float32) * scale_ref[...] + shift_ref[...], 0.0)
    # "same"-conv halo: bf16 scratch; halo rows re-zeroed every step (cheap,
    # and program_id==0 gating is unsafe under megacore sharding — each core
    # has its own uninitialized scratch and only one core sees index 0).
    if pad:
        halo = jnp.zeros((bt, pad, cp), jnp.bfloat16)
        tpad_ref[:, :pad, :] = halo
        tpad_ref[:, pad + out_len:, :] = halo
    tpad_ref[:, pad:pad + out_len, :] = t.astype(jnp.bfloat16)
    acc = _conv_taps_fused(tpad_ref[...], w_ref, kernel_size, out_len)
    y2_ref[...] = acc.astype(y2_ref.dtype)                # bf16 intermediate
    _write_stats(acc, sum_ref, m2_ref)


def _bn_residual_relu_kernel(x_ref, y2_ref, scale_ref, shift_ref, o_ref):
    # folded bn2 + residual + relu.  x_ref is the un-haloed lane-padded f32
    # input: block read directly, no in-kernel re-slicing.
    t = y2_ref[...].astype(jnp.float32) * scale_ref[...] + shift_ref[...]
    o_ref[...] = jnp.maximum(x_ref[...] + t, 0.0).astype(o_ref.dtype)


# ---------------------------------------------------------------------------
# Wrapper helpers
# ---------------------------------------------------------------------------
def _fold_bn(sum_parts, m2_parts, gamma, beta, tile_count, total_count, eps):
    """Combine per-tile (sum, centered M2) into training-mode BN scale/shift.

    Chan et al. parallel-variance combination; biased variance (PyTorch
    BatchNorm training behaviour).
    """
    mean = jnp.sum(sum_parts, axis=0, keepdims=True) / total_count   # (1,1,Cp)
    tile_mean = sum_parts / tile_count                                # (nb,1,Cp)
    m2 = (jnp.sum(m2_parts, axis=0, keepdims=True)
          + tile_count * jnp.sum((tile_mean - mean) ** 2, axis=0, keepdims=True))
    var = jnp.maximum(m2 / total_count, 0.0)
    scale = jax.lax.rsqrt(var + eps) * gamma.reshape(1, 1, -1)
    shift = beta.reshape(1, 1, -1) - mean * scale
    return scale, shift


def _pick_tiling(n, l_pad, c_pad, kernel_size):
    """Per-generation batch-tile size and VMEM limit.

    v5e/v6e: 128 MiB VMEM, one TensorCore  -> big tiles, no split constraint.
    v7x:      64 MiB VMEM, two TensorCores -> >=2 (preferably even) tiles,
                                              smaller per-tile budget.
    """
    vmem_cap = 64 << 20                                   # conservative default
    try:
        info = pltpu.get_tpu_info()
        vmem_cap = int(getattr(info, "vmem_capacity_bytes", vmem_cap) or vmem_cap)
    except Exception:
        pass
    big_vmem = vmem_cap >= (100 << 20)
    budget = (36 << 20) if big_vmem else (20 << 20)
    vmem_limit = (96 << 20) if big_vmem else (40 << 20)

    # Approx. bytes per batch row: double-buffered bf16 in/out blocks, bf16
    # halo scratch, f32 accumulator, K-wide bf16 concatenated LHS, slack.
    per_row = l_pad * c_pad * (8 + 2 + 4 + kernel_size * 2 + 8)
    bt = max(1, min(n, budget // max(per_row, 1)))
    if not big_vmem and n > 1:
        bt = min(bt, max(1, n // 2))       # give both v7x TensorCores work
    while n % bt:
        bt -= 1
    if not big_vmem and n > 1 and (n // bt) % 2:
        cand = bt - 1                       # prefer an even tile count on v7x
        while cand >= 1:
            if n % cand == 0 and (n // cand) % 2 == 0:
                bt = cand
                break
            cand -= 1
    return bt, vmem_limit


# ---------------------------------------------------------------------------
# Public entry points
# ---------------------------------------------------------------------------
def residual_layer_nlc(x_nlc, w1, b1, g1, be1, w2, b2, g2, be2,
                       *, kernel_size, eps=1e-5):
    """ResidualBind residual layer on channels-last input (N, L, C).

    Conv weights are PyTorch-shaped (C_out, C_in, K).  Conv biases b1/b2 are
    accepted for API parity but unused: a per-channel constant added before
    *training-mode* (batch-stat) BatchNorm is exactly cancelled by its mean
    subtraction.  Eval-mode (running-stat) BN would require applying them.
    """
    del b1, b2
    n, l, c = x_nlc.shape
    pad = conv_1d_same_padding(kernel_size)
    cp = -(-c // LANE) * LANE
    pc = cp - c
    lp = l + 2 * pad

    # Layout prep (fused XLA pass): lane-dense channels.  bf16 + L-halo copy
    # feeds the conv stages; the f32 un-haloed copy feeds only stage C.
    x_lane = jnp.pad(x_nlc.astype(jnp.float32), ((0, 0), (0, 0), (0, pc)))
    x_halo = jnp.pad(x_lane, ((0, 0), (pad, pad), (0, 0))).astype(jnp.bfloat16)

    def prep_w(w):
        # (C_out, C_in, K) -> (K, C_in, C_out), channel-pad, flatten to one
        # (K*Cp, Cp) bf16 contraction operand (rows tap-major then c_in).
        wt = jnp.transpose(w, (2, 1, 0)).astype(jnp.float32)
        wt = jnp.pad(wt, ((0, 0), (0, pc), (0, pc)))
        return wt.reshape(kernel_size * cp, cp).astype(jnp.bfloat16)

    w1_p, w2_p = prep_w(w1), prep_w(w2)
    g1_p = jnp.pad(g1.astype(jnp.float32), (0, pc), constant_values=1.0)
    g2_p = jnp.pad(g2.astype(jnp.float32), (0, pc), constant_values=1.0)
    be1_p = jnp.pad(be1.astype(jnp.float32), (0, pc))
    be2_p = jnp.pad(be2.astype(jnp.float32), (0, pc))

    bt, vmem_limit = _pick_tiling(n, lp, cp, kernel_size)
    nb = n // bt
    grid = (nb,)
    cparams = pltpu.CompilerParams(
        dimension_semantics=("parallel",),          # megacore-shard the batch
        vmem_limit_bytes=vmem_limit)

    xp_spec = pl.BlockSpec((bt, lp, cp), lambda i: (i, 0, 0))      # haloed
    act_spec = pl.BlockSpec((bt, l, cp), lambda i: (i, 0, 0))      # un-haloed
    w_spec = pl.BlockSpec((kernel_size * cp, cp), lambda i: (0, 0))
    ch_spec = pl.BlockSpec((1, 1, cp), lambda i: (0, 0, 0))
    stat_spec = pl.BlockSpec((1, 1, cp), lambda i: (i, 0, 0))
    stat_shape = jax.ShapeDtypeStruct((nb, 1, cp), jnp.float32)
    tile_count = float(bt * l)
    total_count = float(n * l)

    # --- stage A: conv1 + batch stats ---------------------------------------
    y1, s1, m1 = pl.pallas_call(
        functools.partial(_conv1_stats_kernel, kernel_size=kernel_size),
        grid=grid,
        in_specs=[xp_spec, w_spec],
        out_specs=(act_spec, stat_spec, stat_spec),
        out_shape=(jax.ShapeDtypeStruct((n, l, cp), jnp.bfloat16),
                   stat_shape, stat_shape),
        compiler_params=cparams,
    )(x_halo, w1_p)
    scale1, shift1 = _fold_bn(s1, m1, g1_p, be1_p, tile_count, total_count, eps)

    # --- stage B: bn1 + relu + conv2 + batch stats ---------------------------
    y2, s2, m2 = pl.pallas_call(
        functools.partial(_bn_relu_conv2_stats_kernel,
                          kernel_size=kernel_size, pad=pad),
        grid=grid,
        in_specs=[act_spec, ch_spec, ch_spec, w_spec],
        out_specs=(act_spec, stat_spec, stat_spec),
        out_shape=(jax.ShapeDtypeStruct((n, l, cp), jnp.bfloat16),
                   stat_shape, stat_shape),
        scratch_shapes=[pltpu.VMEM((bt, lp, cp), jnp.bfloat16)],
        compiler_params=cparams,
    )(y1, scale1, shift1, w2_p)
    scale2, shift2 = _fold_bn(s2, m2, g2_p, be2_p, tile_count, total_count, eps)

    # --- stage C: bn2 + residual add + relu ----------------------------------
    out = pl.pallas_call(
        _bn_residual_relu_kernel,
        grid=grid,
        in_specs=[act_spec, act_spec, ch_spec, ch_spec],
        out_specs=act_spec,
        out_shape=jax.ShapeDtypeStruct((n, l, cp), jnp.float32),
        compiler_params=cparams,
    )(x_lane, y2, scale2, shift2)

    return out[:, :, :c]


def residual_layer(x_ncl, w1, b1, g1, be1, w2, b2, g2, be2,
                   *, kernel_size, eps=1e-5):
    """PyTorch-layout adapter: x is (N, C, L), like nn.Conv1d expects.

    If the surrounding model keeps activations channels-last, call
    residual_layer_nlc directly and skip these two HBM transpose passes.
    """
    out_nlc = residual_layer_nlc(
        jnp.transpose(x_ncl, (0, 2, 1)), w1, b1, g1, be1, w2, b2, g2, be2,
        kernel_size=kernel_size, eps=eps)
    return jnp.transpose(out_nlc, (0, 2, 1))


# ---------------------------------------------------------------------------
# Pure-JAX reference (mirrors the PyTorch forward, including the conv bias,
# which the kernel drops because training-mode BN cancels it)
# ---------------------------------------------------------------------------
def _reference(x, w1, b1, g1, be1, w2, b2, g2, be2, *, pad, eps=1e-5):
    def conv(x, w, b):
        y = jax.lax.conv_general_dilated(
            x, w, window_strides=(1,), padding=[(pad, pad)],
            dimension_numbers=("NCH", "OIH", "NCH"))
        return y + b[None, :, None]

    def bn(x, g, be):
        mean = x.mean(axis=(0, 2), keepdims=True)
        var = ((x - mean) ** 2).mean(axis=(0, 2), keepdims=True)
        return (x - mean) / jnp.sqrt(var + eps) * g[None, :, None] + be[None, :, None]

    t = jax.nn.relu(bn(conv(x, w1, b1), g1, be1))
    t = bn(conv(t, w2, b2), g2, be2)
    return jax.nn.relu(x + t)


if __name__ == "__main__":
    N, C, L, K = 2, 4, 16, 3

    key = jax.random.PRNGKey(0)
    kx, k1, k2, k3, k4 = jax.random.split(key, 5)

    x = jax.random.normal(kx, (N, C, L), jnp.float32)
    # Conv1d params (PyTorch shapes: weight (C_out, C_in, K), bias (C_out,))
    w1 = jax.random.normal(k1, (C, C, K), jnp.float32) * 0.2
    b1 = jax.random.normal(k2, (C,), jnp.float32) * 0.1
    w2 = jax.random.normal(k3, (C, C, K), jnp.float32) * 0.2
    b2 = jax.random.normal(k4, (C,), jnp.float32) * 0.1
    # BatchNorm1d default init: weight=1, bias=0
    g1, be1 = jnp.ones((C,), jnp.float32), jnp.zeros((C,), jnp.float32)
    g2, be2 = jnp.ones((C,), jnp.float32), jnp.zeros((C,), jnp.float32)

    out = residual_layer(x, w1, b1, g1, be1, w2, b2, g2, be2, kernel_size=K)
    out = jax.block_until_ready(out)

    ref = _reference(x, w1, b1, g1, be1, w2, b2, g2, be2,
                     pad=conv_1d_same_padding(K))
    assert out.shape == (N, C, L)
    # bf16 MXU operands + bf16 intermediate activations -> bf16-level tolerance
    assert jnp.allclose(out, ref, atol=5e-2, rtol=5e-2), "mismatch vs reference"

    print("KERNEL_OK")
</pallas_src>

<mosaic_0001>
module attributes {stable_mosaic.version = 11 : i64} {
  func.func @_conv1_stats_kernel(%arg0: i32, %arg1: memref<1x18x128xbf16, #tpu.memory_space<vmem>>, %arg2: memref<384x128xbf16, #tpu.memory_space<vmem>>, %arg3: memref<1x16x128xbf16, #tpu.memory_space<vmem>>, %arg4: memref<1x1x128xf32, #tpu.memory_space<vmem>>, %arg5: memref<1x1x128xf32, #tpu.memory_space<vmem>>) attributes {dimension_semantics = [#tpu.dimension_semantics<parallel>], iteration_bounds = array<i64: 2>, scalar_prefetch = 0 : i64, scratch_operands = 0 : i64, tpu.core_type = #tpu.core_type<tc>, window_params = [{transform_indices = @transform_0, window_bounds = array<i64: 1, 18, 128>}, {pipeline_mode = #tpu.pipeline_mode<synchronous>, transform_indices = @transform_1, window_bounds = array<i64: 384, 128>}, {transform_indices = @transform_2, window_bounds = array<i64: 1, 16, 128>}, {transform_indices = @transform_3, window_bounds = array<i64: 1, 1, 128>}, {transform_indices = @transform_4, window_bounds = array<i64: 1, 1, 128>}]} {
    %c0 = arith.constant 0 : index
    %c0_0 = arith.constant 0 : index
    %c0_1 = arith.constant 0 : index
    %0 = vector.load %arg1[%c0, %c0_0, %c0_1] : memref<1x18x128xbf16, #tpu.memory_space<vmem>>, vector<1x18x128xbf16>
    %1 = vector.extract_strided_slice %0 {offsets = [0, 0, 0], sizes = [1, 16, 128], strides = [1, 1, 1]} : vector<1x18x128xbf16> to vector<1x16x128xbf16>
    %2 = vector.extract_strided_slice %0 {offsets = [0, 1, 0], sizes = [1, 16, 128], strides = [1, 1, 1]} : vector<1x18x128xbf16> to vector<1x16x128xbf16>
    %3 = vector.extract_strided_slice %0 {offsets = [0, 2, 0], sizes = [1, 16, 128], strides = [1, 1, 1]} : vector<1x18x128xbf16> to vector<1x16x128xbf16>
    %4 = tpu.concatenate %1, %2, %3 in 2 : vector<1x16x128xbf16>, vector<1x16x128xbf16>, vector<1x16x128xbf16> -> vector<1x16x384xbf16>
    %c0_2 = arith.constant 0 : index
    %c0_3 = arith.constant 0 : index
    %5 = vector.load %arg2[%c0_2, %c0_3] : memref<384x128xbf16, #tpu.memory_space<vmem>>, vector<384x128xbf16>
    %cst = arith.constant dense<0.000000e+00> : vector<1x16x128xf32>
    %6 = tpu.matmul %4, %5, %cst {dimension_numbers = #tpu.dot_dimension_numbers<[2], [0], [0, 1], [1], [0, 0, 0, 1, 1, 1], [], []>} : vector<1x16x384xbf16>, vector<384x128xbf16>, vector<1x16x128xf32> -> vector<1x16x128xf32>
    %7 = arith.truncf %6 : vector<1x16x128xf32> to vector<1x16x128xbf16>
    %c0_4 = arith.constant 0 : index
    %c0_5 = arith.constant 0 : index
    %c0_6 = arith.constant 0 : index
    %8 = vector.load %arg3[%c0_4, %c0_5, %c0_6] : memref<1x16x128xbf16, #tpu.memory_space<vmem>>, vector<1x16x128xbf16>
    tpu.vector_store %arg3[%c0_4, %c0_5, %c0_6], %7 {strides = array<i32>} : memref<1x16x128xbf16, #tpu.memory_space<vmem>>, vector<1x16x128xbf16>,
    %cst_7 = arith.constant dense<0.000000e+00> : vector<1x128xf32>
    %9 = vector.multi_reduction <add>, %6, %cst_7 [1] : vector<1x16x128xf32> to vector<1x128xf32>
    %10 = vector.shape_cast %9 : vector<1x128xf32> to vector<1x1x128xf32>
    %cst_8 = arith.constant dense<0.000000e+00> : vector<1x128xf32>
    %11 = vector.multi_reduction <add>, %10, %cst_8 [0] : vector<1x1x128xf32> to vector<1x128xf32>
    %12 = vector.shape_cast %11 : vector<1x128xf32> to vector<1x1x128xf32>
    %cst_9 = arith.constant 6.250000e-02 : f32
    %13 = vector.broadcast %cst_9 : f32 to vector<1x1x128xf32>
    %14 = arith.mulf %12, %13 : vector<1x1x128xf32>
    %15 = vector.broadcast %14 : vector<1x1x128xf32> to vector<1x16x128xf32>
    %16 = arith.subf %6, %15 : vector<1x16x128xf32>
    %17 = arith.mulf %16, %16 : vector<1x16x128xf32>
    %cst_10 = arith.constant dense<0.000000e+00> : vector<1x128xf32>
    %18 = vector.multi_reduction <add>, %17, %cst_10 [1] : vector<1x16x128xf32> to vector<1x128xf32>
    %19 = vector.shape_cast %18 : vector<1x128xf32> to vector<1x1x128xf32>
    %cst_11 = arith.constant dense<0.000000e+00> : vector<1x128xf32>
    %20 = vector.multi_reduction <add>, %19, %cst_11 [0] : vector<1x1x128xf32> to vector<1x128xf32>
    %21 = vector.shape_cast %20 : vector<1x128xf32> to vector<1x1x128xf32>
    %c0_12 = arith.constant 0 : index
    %c0_13 = arith.constant 0 : index
    %c0_14 = arith.constant 0 : index
    %22 = vector.load %arg4[%c0_12, %c0_13, %c0_14] : memref<1x1x128xf32, #tpu.memory_space<vmem>>, vector<1x1x128xf32>
    tpu.vector_store %arg4[%c0_12, %c0_13, %c0_14], %12 {strides = array<i32>} : memref<1x1x128xf32, #tpu.memory_space<vmem>>, vector<1x1x128xf32>,
    %c0_15 = arith.constant 0 : index
    %c0_16 = arith.constant 0 : index
    %c0_17 = arith.constant 0 : index
    %23 = vector.load %arg5[%c0_15, %c0_16, %c0_17] : memref<1x1x128xf32, #tpu.memory_space<vmem>>, vector<1x1x128xf32>
    tpu.vector_store %arg5[%c0_15, %c0_16, %c0_17], %21 {strides = array<i32>} : memref<1x1x128xf32, #tpu.memory_space<vmem>>, vector<1x1x128xf32>,
    return
  }
  func.func @transform_0(%arg0: i32) -> (i32, i32, i32) {
    %c0_i32 = arith.constant 0 : i32
    %c0_i32_0 = arith.constant 0 : i32
    %c0_i32_1 = arith.constant 0 : i32
    return %arg0, %c0_i32, %c0_i32_0 : i32, i32, i32
  }
  func.func @transform_1(%arg0: i32) -> (i32, i32) {
    %c0_i32 = arith.constant 0 : i32
    %c0_i32_0 = arith.constant 0 : i32
    %c0_i32_1 = arith.constant 0 : i32
    return %c0_i32, %c0_i32_0 : i32, i32
  }
  func.func @transform_2(%arg0: i32) -> (i32, i32, i32) {
    %c0_i32 = arith.constant 0 : i32
    %c0_i32_0 = arith.constant 0 : i32
    %c0_i32_1 = arith.constant 0 : i32
    return %arg0, %c0_i32, %c0_i32_0 : i32, i32, i32
  }
  func.func @transform_3(%arg0: i32) -> (i32, i32, i32) {
    %c0_i32 = arith.constant 0 : i32
    %c0_i32_0 = arith.constant 0 : i32
    %c0_i32_1 = arith.constant 0 : i32
    return %arg0, %c0_i32, %c0_i32_0 : i32, i32, i32
  }
  func.func @transform_4(%arg0: i32) -> (i32, i32, i32) {
    %c0_i32 = arith.constant 0 : i32
    %c0_i32_0 = arith.constant 0 : i32
    %c0_i32_1 = arith.constant 0 : i32
    return %arg0, %c0_i32, %c0_i32_0 : i32, i32, i32
  }
}

</mosaic_0001>

<llo_original>
// kernel: tpu_custom_call.1
$region0: #{tpu_custom_call.1}
  #allocation0 [shape = 'u32[]', space=smem, size = 0x4, offset = 0x4, fixed_abs, tag = 'smem constant byte address 0x4 - core index']
  #allocation1 [shape = 'u32[72,128]{1,0:T(1,128)}', space=vmem, size = 0x9000, scoped, tag = 'internal scratch']
  %s0 = inlined_call_operand.vmem [shape: bf16[2,18,128], index: 0, kind: input, shape index: {}]
  %s1 = inlined_call_operand.hbm [shape: bf16[384,128], index: 1, kind: input, shape index: {}]
  %s2 = inlined_call_operand.hbm [shape: bf16[2,16,128], index: 2, kind: output, shape index: {0}]
  %s3 = inlined_call_operand.hbm [shape: f32[2,1,128], index: 3, kind: output, shape index: {1}]
  %s4 = inlined_call_operand.hbm [shape: f32[2,1,128], index: 4, kind: output, shape index: {2}]
  %5 = xla_tuple %s2, %s3, %s4
  %s6 = sld [smem:[#allocation0]]
  $region61: #{tpu_custom_call.1} parent=0
    _
  %s8 = ssub.s32 1, %s6
  %s9 = scalar_select 0, %s8, %s6
  $region1: #{tpu_custom_call.1} parent=0
    #allocation2 [shape = 'u8[98304]{0}', space=vmem, size = 0x18000, scoped, tag = 'input window, operand 1, single buffered']
    #allocation3 [shape = 's32[2]{0}', space=sflag, size = 0x8, scoped, tag = 'scoped memory for tpu_custom_call.1']
    #allocation4 [shape = 's32[2]{0}', space=sflag, size = 0x8, scoped, tag = 'scoped memory for tpu_custom_call.1']
    #allocation5 [shape = 'u8[8192]{0}', space=vmem, size = 0x2000, scoped, tag = 'output window, operand 0']
    #allocation6 [shape = 'u8[1024]{0}', space=vmem, size = 0x400, scoped, tag = 'output window, operand 1']
    #allocation7 [shape = 's32[2]{0}', space=sflag, size = 0x8, scoped, tag = 'scoped memory for tpu_custom_call.1']
    #allocation8 [shape = 'u8[1024]{0}', space=vmem, size = 0x400, scoped, tag = 'output window, operand 2']
    %10 = vsyncpa [#allocation3], 0
    %11 = vsyncpa [#allocation4], 0
    %s12 = scalar_lea.sflag [#allocation4], 1
    %13 = vsyncpa %s12, 0
    %14 = vsyncpa [#allocation7], 0
    %s15 = scalar_lea.sflag [#allocation7], 1
    %16 = vsyncpa %s15, 0
    loop: start=0, step=1, limit=4
    $region2: #{tpu_custom_call.1} parent=1 // loop_pre_header
      _
    $region3: #{tpu_custom_call.1} parent=1 // loop_header
      %s18 = sphi 0, %s22
      %p19 = scmp.ge.s32.totalorder %s18, 4
      %s28 = sphi 0, %s30
      %s31 = sphi 0, %s28
      %s32 = sphi 0, %s31
      %s48 = sphi 0, %s32
      %s52 = sphi 0, %s52
      %s54 = sphi 0, %s52
      %s55 = sphi 0, %s54
      %s69 = sphi 0, %s55
      %s75 = sphi 0, %s77
      %s78 = sphi 0, %s75
      %s79 = sphi 0, %s78
      %s95 = sphi 0, %s79
      %s101 = sphi 0, %s103
      %s104 = sphi 0, %s101
      %s105 = sphi 0, %s104
      %s121 = sphi 0, %s105
      %s127 = sphi 0, %s129
      %s130 = sphi 0, %s127
      %s131 = sphi 0, %s130
      %s147 = sphi 0, %s131
    $region4: #{tpu_custom_call.1} parent=1 // loop_header_branch
      %21 = sbr.rel (%p19) target = $region8
    $region5: #{tpu_custom_call.1} parent=1 // loop_body
      %s23 = ssub.s32 %s18, 1
      %s24 = ssub.s32 %s18, 2
      %s25 = sadd.s32 %s18, 1
      %s26 = ssub.s32 %s18, %s25
      %p27 = scmp.eq.s32.totalorder %s26, 0
      %s29 = sadd.s32 %s28, 1
      %s30 = scalar_select %p27, %s28, %s29
      %p33 = pneg %p27
      %p34 = scmp.eq.s32.totalorder %s18, 1
      %p35 = por %p33, %p34
      %p36 = scmp.ne.s32.totalorder %s28, %s31
      %p37 = scmp.eq.s32.totalorder %s18, 0
      %p38 = por %p36, %p37
      %p39 = scmp.ne.s32.totalorder %s28, %s31
      %p40 = scmp.eq.s32.totalorder %s23, 1
      %p41 = por %p39, %p40
      %p42 = scmp.ne.s32.totalorder %s31, %s32
      %p43 = scmp.eq.s32.totalorder %s23, 0
      %p44 = por %p42, %p43
      %p45 = scmp.ne.s32.totalorder %s31, %s32
      %p46 = scmp.eq.s32.totalorder %s24, 1
      %p47 = por %p45, %p46
      %p49 = scmp.ne.s32.totalorder %s32, %s48
      %p50 = scmp.eq.s32.totalorder %s24, 0
      %p51 = por %p49, %p50
      %s53 = sadd.s32 %s52, 1
      %p56 = scmp.eq.s32.totalorder %s18, 1
      %p57 = scmp.ne.s32.totalorder %s52, %s54
      %p58 = scmp.eq.s32.totalorder %s18, 0
      %p59 = por %p57, %p58
      %p60 = scmp.ne.s32.totalorder %s52, %s54
      %p61 = scmp.eq.s32.totalorder %s23, 1
      %p62 = por %p60, %p61
      %p63 = scmp.ne.s32.totalorder %s54, %s55
      %p64 = scmp.eq.s32.totalorder %s23, 0
      %p65 = por %p63, %p64
      %p66 = scmp.ne.s32.totalorder %s54, %s55
      %p67 = scmp.eq.s32.totalorder %s24, 1
      %p68 = por %p66, %p67
      %p70 = scmp.ne.s32.totalorder %s55, %s69
      %p71 = scmp.eq.s32.totalorder %s24, 0
      %p72 = por %p70, %p71
      %s73 = ssub.s32 %s18, %s25
      %p74 = scmp.eq.s32.totalorder %s73, 0
      %s76 = sadd.s32 %s75, 1
      %s77 = scalar_select %p74, %s75, %s76
      %p80 = pneg %p74
      %p81 = scmp.eq.s32.totalorder %s18, 1
      %p82 = por %p80, %p81
      %p83 = scmp.ne.s32.totalorder %s75, %s78
      %p84 = scmp.eq.s32.totalorder %s18, 0
      %p85 = por %p83, %p84
      %p86 = scmp.ne.s32.totalorder %s75, %s78
      %p87 = scmp.eq.s32.totalorder %s23, 1
      %p88 = por %p86, %p87
      %p89 = scmp.ne.s32.totalorder %s78, %s79
      %p90 = scmp.eq.s32.totalorder %s23, 0
      %p91 = por %p89, %p90
      %p92 = scmp.ne.s32.totalorder %s78, %s79
      %p93 = scmp.eq.s32.totalorder %s24, 1
      %p94 = por %p92, %p93
      %p96 = scmp.ne.s32.totalorder %s79, %s95
      %p97 = scmp.eq.s32.totalorder %s24, 0
      %p98 = por %p96, %p97
      %s99 = ssub.s32 %s18, %s25
      %p100 = scmp.eq.s32.totalorder %s99, 0
      %s102 = sadd.s32 %s101, 1
      %s103 = scalar_select %p100, %s101, %s102
      %p106 = pneg %p100
      %p107 = scmp.eq.s32.totalorder %s18, 1
      %p108 = por %p106, %p107
      %p109 = scmp.ne.s32.totalorder %s101, %s104
      %p110 = scmp.eq.s32.totalorder %s18, 0
      %p111 = por %p109, %p110
      %p112 = scmp.ne.s32.totalorder %s101, %s104
      %p113 = scmp.eq.s32.totalorder %s23, 1
      %p114 = por %p112, %p113
      %p115 = scmp.ne.s32.totalorder %s104, %s105
      %p116 = scmp.eq.s32.totalorder %s23, 0
      %p117 = por %p115, %p116
      %p118 = scmp.ne.s32.totalorder %s104, %s105
      %p119 = scmp.eq.s32.totalorder %s24, 1
      %p120 = por %p118, %p119
      %p122 = scmp.ne.s32.totalorder %s105, %s121
      %p123 = scmp.eq.s32.totalorder %s24, 0
      %p124 = por %p122, %p123
      %s125 = ssub.s32 %s18, %s25
      %p126 = scmp.eq.s32.totalorder %s125, 0
      %s128 = sadd.s32 %s127, 1
      %s129 = scalar_select %p126, %s127, %s128
      %p132 = pneg %p126
      %p133 = scmp.eq.s32.totalorder %s18, 1
      %p134 = por %p132, %p133
      %p135 = scmp.ne.s32.totalorder %s127, %s130
      %p136 = scmp.eq.s32.totalorder %s18, 0
      %p137 = por %p135, %p136
      %p138 = scmp.ne.s32.totalorder %s127, %s130
      %p139 = scmp.eq.s32.totalorder %s23, 1
      %p140 = por %p138, %p139
      %p141 = scmp.ne.s32.totalorder %s130, %s131
      %p142 = scmp.eq.s32.totalorder %s23, 0
      %p143 = por %p141, %p142
      %p144 = scmp.ne.s32.totalorder %s130, %s131
      %p145 = scmp.eq.s32.totalorder %s24, 1
      %p146 = por %p144, %p145
      %p148 = scmp.ne.s32.totalorder %s131, %s147
      %p149 = scmp.eq.s32.totalorder %s24, 0
      %p150 = por %p148, %p149
      %p151 = scmp.le.s32.totalorder 1, %s18
      %p152 = scmp.lt.s32.totalorder %s18, 3
      %p153 = pnand %p151, %p152
      %p154 = pneg %p153
      // Predicated region
      $region9: #{tpu_custom_call.1} parent=5 // pred_check
        _
      $region10: #{tpu_custom_call.1} parent=5 // pred_check_branch
        %156 = sbr.rel (%p153) target = $region12
      $region11: #{tpu_custom_call.1} parent=5 // pred_region
        %s157 = ssub.s32 %s18, 1
        // Predicated region
        $region13: #{tpu_custom_call.1} parent=11 // pred_check
          %p158 = pneg %p65
        $region14: #{tpu_custom_call.1} parent=11 // pred_check_branch
          %160 = sbr.rel (%p158) target = $region16
        $region15: #{tpu_custom_call.1} parent=11 // pred_region
          %162 = vsyncadd [#allocation3], 0
          %s163 = sshll.u32 %s1, 4
          %s164 = int_to_ptr.hbm [resolvable:$true] %s163
          %s165 = sshll.u32 [#allocation2], 4
          %s166 = int_to_ptr.vmem [resolvable:$true] %s165
          %171 = dma.hbm_to_vmem [thread:$0]  %s164, 3072, %s166, [#allocation3], 64, 64, 4
        $region16: #{tpu_custom_call.1} parent=11 // pred_fallthru
          _
      $region12: #{tpu_custom_call.1} parent=5 // pred_fallthru
        _
      %p172 = scmp.lt.s32.totalorder %s18, 2
      // Predicated region
      $region17: #{tpu_custom_call.1} parent=5 // pred_check
        %p173 = pneg %p172
      $region18: #{tpu_custom_call.1} parent=5 // pred_check_branch
        %175 = sbr.rel (%p173) target = $region20
      $region19: #{tpu_custom_call.1} parent=5 // pred_region
        // Predicated region
        $region21: #{tpu_custom_call.1} parent=19 // pred_check
          %p176 = pneg %p38
        $region22: #{tpu_custom_call.1} parent=19 // pred_check_branch
          %178 = sbr.rel (%p176) target = $region24
        $region23: #{tpu_custom_call.1} parent=19 // pred_region
          %p179 = scmp.lt.s32.totalorder %s18, 1
          %s180 = scalar_select %p179, %s18, 1
          %s181 = smul.addr %s180, 3
          %s182 = smul.addr %s181, 4
          %s183 = scalar_lea.vmem %s0, %s182
        $region24: #{tpu_custom_call.1} parent=19 // pred_fallthru
          _
      $region20: #{tpu_custom_call.1} parent=5 // pred_fallthru
        _
      %p184 = scmp.le.s32.totalorder 1, %s18
      %p185 = scmp.lt.s32.totalorder %s18, 3
      %p186 = pnand %p184, %p185
      %p187 = pneg %p186
      // Predicated region
      $region25: #{tpu_custom_call.1} parent=5 // pred_check
        _
      $region26: #{tpu_custom_call.1} parent=5 // pred_check_branch
        %189 = sbr.rel (%p186) target = $region28
      $region27: #{tpu_custom_call.1} parent=5 // pred_region
        %s190 = ssub.s32 %s18, 1
        // Predicated region
        $region29: #{tpu_custom_call.1} parent=27 // pred_check
          %p191 = pneg %p65
        $region30: #{tpu_custom_call.1} parent=27 // pred_check_branch
          %193 = sbr.rel (%p191) target = $region32
        $region31: #{tpu_custom_call.1} parent=27 // pred_region
          %195 = dma.done [#allocation3], 3072
        $region32: #{tpu_custom_call.1} parent=27 // pred_fallthru
          _
        %p196 = scmp.lt.s32.totalorder %s23, 1
        %s197 = scalar_select %p196, %s23, 1
        %s198 = smul.addr %s197, 3
        %s199 = smul.addr %s198, 4
        %s200 = scalar_lea.vmem %s0, %s199
        %p201 = pneg %p44
        %p202 = pneg %p41
        %p203 = pneg %p65
        %p204 = pneg %p62
        %p205 = pneg %p91
        %p206 = pneg %p88
        %s207 = sand.u32 %s78, 1
        %s208 = scalar_lea.sflag [#allocation4], %s207
        %s209 = sand.u32 %s78, 1
        %s210 = smul.addr %s209, 8
        %s211 = scalar_lea.vmem [#allocation5], %s210
        %p212 = pneg %p117
        %p213 = pneg %p114
        %s214 = sand.u32 %s23, 1
        %s215 = scalar_lea.sflag [#allocation7], %s214
        %s216 = sand.u32 %s104, 1
        %s217 = scalar_lea.vmem [#allocation6], %s216
        %p218 = pneg %p143
        %p219 = pneg %p140
        %s220 = sand.u32 %s23, 1
        %s221 = scalar_lea.sflag [#allocation7], %s220
        %s222 = sand.u32 %s130, 1
        %s223 = scalar_lea.vmem [#allocation8], %s222
        %p224 = scmp.lt.s32.totalorder %s23, 1
        %s225 = scalar_select %p224, %s23, 1
        %s226 = smul.addr %s225, 3
        %s227 = smul.addr %s226, 4
        %s228 = scalar_lea.vmem %s0, %s227
        %v229 = vld [vmem:[%s228] sm:$0xf]
        %v230 = vld [vmem:[%s228 + $0x4] sm:$0xf]
        %v231 = vld [vmem:[%s228 + $0x8] sm:$0x1]
        %v234 = vunpack.c.l.b16 %v229
        %v235 = vunpack.c.l.b16 %v230
        %v236 = vpack.c.b16 %v235, %v234
        %v239 = vunpack.c.l.b16 %v231
        %v240 = vpack.c.b16 %v239, %v239
        %vm241 = vsmask.f32 7424
        %v243 = vshrl.u32 %v236, 16
        %v245 = vshll.u32 %v236, 16
        %v247 = vrot.slane %v245, 1
        %v248 = vor.u32 %v243, %v247
        %v250 = vshll.u32 %v240, 16
        %v252 = vrot.slane %v250, 1
        %v253 = vsel %vm241, %v248, %v252
        %vm255 = vcmask 1046528
        %v256 = vrot.slane %v236, 1
        %v257 = vrot.slane %v240, 1
        %v258 = vsel %vm255, %v256, %v257
        %v260 = vld [vmem:[#allocation2] sm:$0xf]
        %v261 = vld [vmem:[#allocation2 + $0x4] sm:$0xf]
        %v262 = vld [vmem:[#allocation2 + $0x8] sm:$0xf]
        %v263 = vld [vmem:[#allocation2 + $0xc] sm:$0xf]
        %v264 = vld [vmem:[#allocation2 + $0x10] sm:$0xf]
        %v265 = vld [vmem:[#allocation2 + $0x14] sm:$0xf]
        %v266 = vld [vmem:[#allocation2 + $0x18] sm:$0xf]
        %v267 = vld [vmem:[#allocation2 + $0x1c] sm:$0xf]
        %v268 = vld [vmem:[#allocation2 + $0x20] sm:$0xf]
        %v269 = vld [vmem:[#allocation2 + $0x24] sm:$0xf]
        %v270 = vld [vmem:[#allocation2 + $0x28] sm:$0xf]
        %v271 = vld [vmem:[#allocation2 + $0x2c] sm:$0xf]
        %v272 = vld [vmem:[#allocation2 + $0x30] sm:$0xf]
        %v273 = vld [vmem:[#allocation2 + $0x34] sm:$0xf]
        %v274 = vld [vmem:[#allocation2 + $0x38] sm:$0xf]
        %v275 = vld [vmem:[#allocation2 + $0x3c] sm:$0xf]
        %v276 = vld [vmem:[#allocation2 + $0x40] sm:$0xf]
        %v277 = vld [vmem:[#allocation2 + $0x44] sm:$0xf]
        %v278 = vld [vmem:[#allocation2 + $0x48] sm:$0xf]
        %v279 = vld [vmem:[#allocation2 + $0x4c] sm:$0xf]
        %v280 = vld [vmem:[#allocation2 + $0x50] sm:$0xf]
        %v281 = vld [vmem:[#allocation2 + $0x54] sm:$0xf]
        %v282 = vld [vmem:[#allocation2 + $0x58] sm:$0xf]
        %v283 = vld [vmem:[#allocation2 + $0x5c] sm:$0xf]
        %v284 = vld [vmem:[#allocation2 + $0x60] sm:$0xf]
        %v285 = vld [vmem:[#allocation2 + $0x64] sm:$0xf]
        %v286 = vld [vmem:[#allocation2 + $0x68] sm:$0xf]
        %v287 = vld [vmem:[#allocation2 + $0x6c] sm:$0xf]
        %v288 = vld [vmem:[#allocation2 + $0x70] sm:$0xf]
        %v289 = vld [vmem:[#allocation2 + $0x74] sm:$0xf]
        %v290 = vld [vmem:[#allocation2 + $0x78] sm:$0xf]
        %v291 = vld [vmem:[#allocation2 + $0x7c] sm:$0xf]
        %v292 = vld [vmem:[#allocation2 + $0x80] sm:$0xf]
        %v293 = vld [vmem:[#allocation2 + $0x84] sm:$0xf]
        %v294 = vld [vmem:[#allocation2 + $0x88] sm:$0xf]
        %v295 = vld [vmem:[#allocation2 + $0x8c] sm:$0xf]
        %v296 = vld [vmem:[#allocation2 + $0x90] sm:$0xf]
        %v297 = vld [vmem:[#allocation2 + $0x94] sm:$0xf]
        %v298 = vld [vmem:[#allocation2 + $0x98] sm:$0xf]
        %v299 = vld [vmem:[#allocation2 + $0x9c] sm:$0xf]
        %v300 = vld [vmem:[#allocation2 + $0xa0] sm:$0xf]
        %v301 = vld [vmem:[#allocation2 + $0xa4] sm:$0xf]
        %v302 = vld [vmem:[#allocation2 + $0xa8] sm:$0xf]
        %v303 = vld [vmem:[#allocation2 + $0xac] sm:$0xf]
        %v304 = vld [vmem:[#allocation2 + $0xb0] sm:$0xf]
        %v305 = vld [vmem:[#allocation2 + $0xb4] sm:$0xf]
        %v306 = vld [vmem:[#allocation2 + $0xb8] sm:$0xf]
        %v307 = vld [vmem:[#allocation2 + $0xbc] sm:$0xf]
        %v356 = vunpack.c.l.b16 %v260
        %v357 = vunpack.c.l.b16 %v261
        %v358 = vunpack.c.l.b16 %v262
        %v359 = vunpack.c.l.b16 %v263
        %v360 = vunpack.c.l.b16 %v264
        %v361 = vunpack.c.l.b16 %v265
        %v362 = vunpack.c.l.b16 %v266
        %v363 = vunpack.c.l.b16 %v267
        %v364 = vunpack.c.l.b16 %v268
        %v365 = vunpack.c.l.b16 %v269
        %v366 = vunpack.c.l.b16 %v270
        %v367 = vunpack.c.l.b16 %v271
        %v368 = vunpack.c.l.b16 %v272
        %v369 = vunpack.c.l.b16 %v273
        %v370 = vunpack.c.l.b16 %v274
        %v371 = vunpack.c.l.b16 %v275
        %v372 = vunpack.c.l.b16 %v276
        %v373 = vunpack.c.l.b16 %v277
        %v374 = vunpack.c.l.b16 %v278
        %v375 = vunpack.c.l.b16 %v279
        %v376 = vunpack.c.l.b16 %v280
        %v377 = vunpack.c.l.b16 %v281
        %v378 = vunpack.c.l.b16 %v282
        %v379 = vunpack.c.l.b16 %v283
        %v380 = vunpack.c.l.b16 %v284
        %v381 = vunpack.c.l.b16 %v285
        %v382 = vunpack.c.l.b16 %v286
        %v383 = vunpack.c.l.b16 %v287
        %v384 = vunpack.c.l.b16 %v288
        %v385 = vunpack.c.l.b16 %v289
        %v386 = vunpack.c.l.b16 %v290
        %v387 = vunpack.c.l.b16 %v291
        %v388 = vunpack.c.l.b16 %v292
        %v389 = vunpack.c.l.b16 %v293
        %v390 = vunpack.c.l.b16 %v294
        %v391 = vunpack.c.l.b16 %v295
        %v392 = vunpack.c.l.b16 %v296
        %v393 = vunpack.c.l.b16 %v297
        %v394 = vunpack.c.l.b16 %v298
        %v395 = vunpack.c.l.b16 %v299
        %v396 = vunpack.c.l.b16 %v300
        %v397 = vunpack.c.l.b16 %v301
        %v398 = vunpack.c.l.b16 %v302
        %v399 = vunpack.c.l.b16 %v303
        %v400 = vunpack.c.l.b16 %v304
        %v401 = vunpack.c.l.b16 %v305
        %v402 = vunpack.c.l.b16 %v306
        %v403 = vunpack.c.l.b16 %v307
        %v404 = vpack.c.b16 %v357, %v356
        %v405 = vpack.c.b16 %v359, %v358
        %v406 = vpack.c.b16 %v361, %v360
        %v407 = vpack.c.b16 %v363, %v362
        %v408 = vpack.c.b16 %v365, %v364
        %v409 = vpack.c.b16 %v367, %v366
        %v410 = vpack.c.b16 %v369, %v368
        %v411 = vpack.c.b16 %v371, %v370
        %v412 = vpack.c.b16 %v373, %v372
        %v413 = vpack.c.b16 %v375, %v374
        %v414 = vpack.c.b16 %v377, %v376
        %v415 = vpack.c.b16 %v379, %v378
        %v416 = vpack.c.b16 %v381, %v380
        %v417 = vpack.c.b16 %v383, %v382
        %v418 = vpack.c.b16 %v385, %v384
        %v419 = vpack.c.b16 %v387, %v386
        %v420 = vpack.c.b16 %v389, %v388
        %v421 = vpack.c.b16 %v391, %v390
        %v422 = vpack.c.b16 %v393, %v392
        %v423 = vpack.c.b16 %v395, %v394
        %v424 = vpack.c.b16 %v397, %v396
        %v425 = vpack.c.b16 %v399, %v398
        %v426 = vpack.c.b16 %v401, %v400
        %v427 = vpack.c.b16 %v403, %v402
        %452 = vmatpush.bf16.msra.mxu0 %v411
        %453 = vmatpush.bf16.msra.mxu0 %v410
        %454 = vmatpush.bf16.msra.mxu0 %v409
        %455 = vmatpush.bf16.msra.mxu0 %v408
        %456 = vmatpush.bf16.msra.mxu0 %v407
        %457 = vmatpush.bf16.msra.mxu0 %v406
        %458 = vmatpush.bf16.msra.mxu0 %v405
        %459 = vmatpush.bf16.msra.mxu0 %v404
        %460 = vmatmul.bf16.gmra.mxu0 %v236
        %v461 = vpop.f32.mrf.mxu0
        %v462 = vadd.f32 0.0, %v461
        %v463 = vpop.f32.mrf.mxu0
        %v464 = vadd.f32 0.0, %v463
        %465 = vdwg.mxu0
        %466 = vmatpush.bf16.msra.mxu0 %v419
        %467 = vmatpush.bf16.msra.mxu0 %v418
        %468 = vmatpush.bf16.msra.mxu0 %v417
        %469 = vmatpush.bf16.msra.mxu0 %v416
        %470 = vmatpush.bf16.msra.mxu0 %v415
        %471 = vmatpush.bf16.msra.mxu0 %v414
        %472 = vmatpush.bf16.msra.mxu0 %v413
        %473 = vmatpush.bf16.msra.mxu0 %v412
        %474 = vmatmul.bf16.gmra.mxu0 %v253
        %v475 = vpop.f32.mrf.mxu0
        %v476 = vadd.f32 %v462, %v475
        %v477 = vpop.f32.mrf.mxu0
        %v478 = vadd.f32 %v464, %v477
        %479 = vdwg.mxu0
        %480 = vmatpush.bf16.msra.mxu0 %v427
        %481 = vmatpush.bf16.msra.mxu0 %v426
        %482 = vmatpush.bf16.msra.mxu0 %v425
        %483 = vmatpush.bf16.msra.mxu0 %v424
        %484 = vmatpush.bf16.msra.mxu0 %v423
        %485 = vmatpush.bf16.msra.mxu0 %v422
        %486 = vmatpush.bf16.msra.mxu0 %v421
        %487 = vmatpush.bf16.msra.mxu0 %v420
        %488 = vmatmul.bf16.gmra.mxu0 %v258
        %v489 = vpop.f32.mrf.mxu0
        %v490 = vadd.f32 %v476, %v489
        %v491 = vpop.f32.mrf.mxu0
        %v492 = vadd.f32 %v478, %v491
        %493 = vdwg.mxu0
        %v494 = vpack.c.bf16 %v490, %v490
        %v495 = vpack.c.bf16 %v492, %v492
        %496 = vst [vmem:[%s211] sm:$0xf] %v494
        %497 = vst [vmem:[%s211 + $0x4] sm:$0xf] %v495
        %v498 = vadd.f32 %v490, %v492
        %v499 = vrot.slane %v498, 4
        %v500 = vadd.f32 %v498, %v499
        %v501 = vrot.slane %v500, 2
        %v502 = vadd.f32 %v500, %v501
        %v503 = vrot.slane %v502, 1
        %v504 = vadd.f32 %v502, %v503
        %v505 = vadd.f32 %v504, 0.0
        %v506 = vmul.f32 %v505, 0.0625
        %v507 = vsub.f32 %v490, %v506
        %v508 = vsub.f32 %v492, %v506
        %v509 = vmul.f32 %v507, %v507
        %v510 = vmul.f32 %v508, %v508
        %v511 = vadd.f32 %v509, %v510
        %v512 = vrot.slane %v511, 4
        %v513 = vadd.f32 %v511, %v512
        %v514 = vrot.slane %v513, 2
        %v515 = vadd.f32 %v513, %v514
        %v516 = vrot.slane %v515, 1
        %v517 = vadd.f32 %v515, %v516
        %v518 = vadd.f32 %v517, 0.0
        %519 = vst [vmem:[%s217] sm:$0x1] %v505
        %520 = vst [vmem:[%s223] sm:$0x1] %v518
        %s521 = sand.u32 %s78, 1
        %s522 = scalar_lea.sflag [#allocation4], %s521
        %s523 = sand.u32 %s78, 1
        %s524 = smul.addr %s523, 8
        %s525 = scalar_lea.vmem [#allocation5], %s524
        %s526 = sand.u32 %s23, 1
        %s527 = scalar_lea.sflag [#allocation7], %s526
        %s528 = sand.u32 %s104, 1
        %s529 = scalar_lea.vmem [#allocation6], %s528
        %s530 = sand.u32 %s23, 1
        %s531 = scalar_lea.sflag [#allocation7], %s530
        %s532 = sand.u32 %s130, 1
        %s533 = scalar_lea.vmem [#allocation8], %s532
        // Predicated region
        $region33: #{tpu_custom_call.1} parent=27 // pred_check
          %p534 = pneg %p88
        $region34: #{tpu_custom_call.1} parent=27 // pred_check_branch
          %536 = sbr.rel (%p534) target = $region36
        $region35: #{tpu_custom_call.1} parent=27 // pred_region
          %538 = vsyncadd %s522, 0
          %s539 = smul.addr %s23, 2
          %s540 = smul.addr %s539, 4
          %s541 = scalar_lea.hbm %s2, %s540
          %s542 = sshll.u32 %s525, 4
          %s543 = int_to_ptr.vmem [resolvable:$true] %s542
          %s544 = sshll.u32 %s541, 4
          %s545 = int_to_ptr.hbm [resolvable:$true] %s544
          %550 = dma.vmem_to_hbm [thread:$0]  %s543, 128, %s545, %s522, 64, 64, 4
        $region36: #{tpu_custom_call.1} parent=27 // pred_fallthru
          _
        // Predicated region
        $region37: #{tpu_custom_call.1} parent=27 // pred_check
          %p551 = pneg %p114
        $region38: #{tpu_custom_call.1} parent=27 // pred_check_branch
          %553 = sbr.rel (%p551) target = $region40
        $region39: #{tpu_custom_call.1} parent=27 // pred_region
          %555 = vsyncadd %s527, 0
          %s556 = scalar_lea.hbm %s3, %s23
          %s558 = sshll.u32 %s529, 4
          %s559 = int_to_ptr.vmem [resolvable:$true] %s558
          %s560 = sshll.u32 %s556, 4
          %s561 = int_to_ptr.hbm [resolvable:$true] %s560
          %563 = dma.vmem_to_hbm [thread:$0]  %s559, 16, %s561, %s527
        $region40: #{tpu_custom_call.1} parent=27 // pred_fallthru
          _
        // Predicated region
        $region41: #{tpu_custom_call.1} parent=27 // pred_check
          %p564 = pneg %p140
        $region42: #{tpu_custom_call.1} parent=27 // pred_check_branch
          %566 = sbr.rel (%p564) target = $region44
        $region43: #{tpu_custom_call.1} parent=27 // pred_region
          %568 = vsyncadd %s531, 0
          %s569 = scalar_lea.hbm %s4, %s23
          %s571 = sshll.u32 %s533, 4
          %s572 = int_to_ptr.vmem [resolvable:$true] %s571
          %s573 = sshll.u32 %s569, 4
          %s574 = int_to_ptr.hbm [resolvable:$true] %s573
          %576 = dma.vmem_to_hbm [thread:$0]  %s572, 16, %s574, %s531
        $region44: #{tpu_custom_call.1} parent=27 // pred_fallthru
          _
      $region28: #{tpu_custom_call.1} parent=5 // pred_fallthru
        _
      %p577 = scmp.le.s32.totalorder 2, %s18
      // Predicated region
      $region45: #{tpu_custom_call.1} parent=5 // pred_check
        %p578 = pneg %p577
      $region46: #{tpu_custom_call.1} parent=5 // pred_check_branch
        %580 = sbr.rel (%p578) target = $region48
      $region47: #{tpu_custom_call.1} parent=5 // pred_region
        %s581 = ssub.s32 %s18, 2
        // Predicated region
        $region49: #{tpu_custom_call.1} parent=47 // pred_check
          %p582 = pneg %p94
        $region50: #{tpu_custom_call.1} parent=47 // pred_check_branch
          %584 = sbr.rel (%p582) target = $region52
        $region51: #{tpu_custom_call.1} parent=47 // pred_region
          %s585 = sand.u32 %s79, 1
          %s586 = scalar_lea.sflag [#allocation4], %s585
          %s587 = sand.u32 %s79, 1
          %s588 = smul.addr %s587, 8
          %s589 = scalar_lea.vmem [#allocation5], %s588
          %591 = dma.done %s586, 128
        $region52: #{tpu_custom_call.1} parent=47 // pred_fallthru
          _
        // Predicated region
        $region53: #{tpu_custom_call.1} parent=47 // pred_check
          %p592 = pneg %p120
        $region54: #{tpu_custom_call.1} parent=47 // pred_check_branch
          %594 = sbr.rel (%p592) target = $region56
        $region55: #{tpu_custom_call.1} parent=47 // pred_region
          %s595 = sand.u32 %s24, 1
          %s596 = scalar_lea.sflag [#allocation7], %s595
          %s597 = sand.u32 %s105, 1
          %s598 = scalar_lea.vmem [#allocation6], %s597
          %600 = dma.done %s596, 16
        $region56: #{tpu_custom_call.1} parent=47 // pred_fallthru
          _
        // Predicated region
        $region57: #{tpu_custom_call.1} parent=47 // pred_check
          %p601 = pneg %p146
        $region58: #{tpu_custom_call.1} parent=47 // pred_check_branch
          %603 = sbr.rel (%p601) target = $region60
        $region59: #{tpu_custom_call.1} parent=47 // pred_region
          %s604 = sand.u32 %s24, 1
          %s605 = scalar_lea.sflag [#allocation7], %s604
          %s606 = sand.u32 %s131, 1
          %s607 = scalar_lea.vmem [#allocation8], %s606
          %609 = dma.done %s605, 16
        $region60: #{tpu_custom_call.1} parent=47 // pred_fallthru
          _
      $region48: #{tpu_custom_call.1} parent=5 // pred_fallthru
        _
    $region6: #{tpu_custom_call.1} parent=1 // loop_footer
      %s22 = sadd.s32 1, %s18
    $region7: #{tpu_custom_call.1} parent=1 // loop_footer_branch
      %17 = sbr.rel target = $region3
    $region8: #{tpu_custom_call.1} parent=1 // loop_exit
      _
    %610 = vsyncpa [#allocation3], 1
    %s611 = scalar_lea.sflag [#allocation3], 1
    %612 = vsyncpa %s611, 1
    %613 = vsyncpa [#allocation4], 1
    %s614 = scalar_lea.sflag [#allocation4], 1
    %615 = vsyncpa %s614, 1
    %616 = vsyncpa [#allocation7], 1
    %s617 = scalar_lea.sflag [#allocation7], 1
    %618 = vsyncpa %s617, 1

</llo_original>
